<compile_context>
chip_gen: v5e
topology: v5e:2x2
jax: 0.10.0
libtpu: 0.0.40
codegen_flags: <defaults>
</compile_context>

<pallas_src>
import jax
import jax.numpy as jnp
from jax.experimental import pallas as pl
from jax.experimental.pallas import tpu as pltpu

BN_EPS = 1e-5
LANE = 128
SUBLANE = 8


# --------------------------------------------------------------------------- #
# Kernel: x_tile @ W_a -> relu -> @ W_b -> relu -> @ W_c  (+ biases)           #
# All BN / V-projection math is pre-folded into (W_a, b_a), (W_b, b_b).        #
# --------------------------------------------------------------------------- #
def trunknet_kernel(x_ref, wa_ref, ba_ref, wb_ref, bb_ref, wc_ref, bc_ref, o_ref):
    x = x_ref[...]

    # fused: (V projection) -> fc1 -> BN1(eval) -> relu   (dropout == identity)
    h = jnp.dot(x, wa_ref[...], preferred_element_type=jnp.float32) + ba_ref[...]
    h = jnp.maximum(h, 0.0)

    # fused: fc2 -> BN2(eval) -> relu                     (dropout == identity)
    h = jnp.dot(h.astype(wb_ref.dtype), wb_ref[...],
                preferred_element_type=jnp.float32) + bb_ref[...]
    h = jnp.maximum(h, 0.0)

    # fc3
    out = jnp.dot(h.astype(wc_ref.dtype), wc_ref[...],
                  preferred_element_type=jnp.float32) + bc_ref[...]
    o_ref[...] = out.astype(o_ref.dtype)


# --------------------------------------------------------------------------- #
# Offline parameter folding (runs ONCE, at build time, never per forward).     #
# --------------------------------------------------------------------------- #
def fold_params(p, compute_dtype):
    """Fold V->fc1->BN1 and fc2->BN2; zero-pad feature dim to a multiple of 128."""
    s1 = p["g1"] * jax.lax.rsqrt(p["rv1"] + BN_EPS)          # (1, H)
    s2 = p["g2"] * jax.lax.rsqrt(p["rv2"] + BN_EPS)          # (1, H)

    # V projection folded into fc1, then BN1 folded in (column-wise scale).
    wa = (p["wv"] @ p["w1"]) * s1                             # (D_in, H)
    ba = ((p["bv"] @ p["w1"] + p["b1"]) - p["rm1"]) * s1 + p["be1"]

    # BN2 folded into fc2.
    wb = p["w2"] * s2                                         # (H, H)
    bb = (p["b2"] - p["rm2"]) * s2 + p["be2"]

    wc = p["w3"]                                              # (H, H)
    bc = p["b3"]

    H = wa.shape[1]
    Hp = max(LANE, pl.cdiv(H, LANE) * LANE)

    pad_c = lambda a: jnp.pad(a, ((0, 0), (0, Hp - a.shape[1])))
    pad_r = lambda a: jnp.pad(a, ((0, Hp - a.shape[0]), (0, 0)))

    folded = dict(
        wa=pad_c(wa).astype(compute_dtype),
        ba=pad_c(ba).astype(jnp.float32),     # epilogue stays f32 (v5e-friendly)
        wb=pad_c(pad_r(wb)).astype(compute_dtype),
        bb=pad_c(bb).astype(jnp.float32),
        wc=pad_c(pad_r(wc)).astype(compute_dtype),
        bc=pad_c(bc).astype(jnp.float32),
    )
    return folded, Hp


# --------------------------------------------------------------------------- #
# Builder: folds params once, returns a jitted forward(x) closure.             #
# --------------------------------------------------------------------------- #
def build_trunknet_forward(params, *, compute_dtype=jnp.bfloat16,
                           out_dtype=None, batch_tile=8192):
    """Returns forward(x) -> (B, H) array of `out_dtype` (default = compute_dtype)."""
    out_dtype = compute_dtype if out_dtype is None else out_dtype
    fp, Hp = fold_params(params, compute_dtype)
    D_in = params["wv"].shape[0]
    H = params["w3"].shape[1]

    cbytes = jnp.dtype(compute_dtype).itemsize
    obytes = jnp.dtype(out_dtype).itemsize

    # Resident-weight budget check (matters only if hidden_size scales up).
    weight_bytes = ((D_in * Hp + 2 * Hp * Hp) * cbytes + 3 * Hp * 4) * 2  # x2: buffering
    if weight_bytes > 48 * 2**20:
        # TODO(synk): tile fc2/fc3 over an N grid axis instead of keeping resident.
        raise ValueError("resident W_b/W_c exceed safe VMEM budget; tile over N")

    @jax.jit
    def forward(x):
        B = x.shape[0]

        # Batch tile: multiple of 8 sublanes, as large as possible (>= 2 tiles only
        # when the batch itself is > batch_tile; fewer/larger tiles amortize the
        # ~0.35 us per-grid-step cost, which dominates this HBM-streaming kernel).
        B8 = pl.cdiv(B, SUBLANE) * SUBLANE
        tb = min(batch_tile, B8)
        tb = max(SUBLANE, (tb // SUBLANE) * SUBLANE)
        Bp = pl.cdiv(B8, tb) * tb
        n_tiles = Bp // tb

        # Do NOT pad D_in to 128: K=16 MXU slack is free while HBM-bound, padding
        # the streamed x would roughly double the read traffic.
        x_p = jnp.pad(x, ((0, Bp - B), (0, 0))).astype(compute_dtype)

        # VMEM footprint (double-buffered streams + resident weights) -> scoped limit.
        stream_bytes = tb * (D_in * cbytes + Hp * obytes) * 2
        need = weight_bytes + stream_bytes
        vmem_limit = int(min(max(2 * need, 32 * 2**20), 56 * 2**20))

        const = lambda i: (0, 0)   # weights/biases: block index never changes -> resident

        grid_spec = pltpu.PrefetchScalarGridSpec(
            num_scalar_prefetch=0,
            grid=(n_tiles,),
            in_specs=[
                pl.BlockSpec((tb, D_in), lambda i: (i, 0)),      # streamed x tile
                pl.BlockSpec((D_in, Hp), const),                 # W_a
                pl.BlockSpec((1, Hp), const),                    # b_a
                pl.BlockSpec((Hp, Hp), const),                   # W_b
                pl.BlockSpec((1, Hp), const),                    # b_b
                pl.BlockSpec((Hp, Hp), const),                   # W_c
                pl.BlockSpec((1, Hp), const),                    # b_c
            ],
            out_specs=pl.BlockSpec((tb, Hp), lambda i: (i, 0)),  # lane-dense writeback
        )

        out_p = pl.pallas_call(
            trunknet_kernel,
            out_shape=jax.ShapeDtypeStruct((Bp, Hp), out_dtype),
            grid_spec=grid_spec,
            compiler_params=pltpu.CompilerParams(
                dimension_semantics=("parallel",),   # megacore split when n_tiles >= 2
                vmem_limit_bytes=vmem_limit,
            ),
        )(x_p, fp["wa"], fp["ba"], fp["wb"], fp["bb"], fp["wc"], fp["bc"])

        return out_p[:B, :H]

    return forward


# --------------------------------------------------------------------------- #
# Deterministic synthetic parameters (linear weights pre-transposed (in, out)) #
# --------------------------------------------------------------------------- #
def make_params(key, input_size, hidden_size):
    ks = jax.random.split(key, 16)

    def lin(k, fan_in, fan_out):
        bound = 1.0 / jnp.sqrt(fan_in)
        kw, kb = jax.random.split(k)
        w = jax.random.uniform(kw, (fan_in, fan_out), jnp.float32, -bound, bound)
        b = jax.random.uniform(kb, (1, fan_out), jnp.float32, -bound, bound)
        return w, b

    wq, bq = lin(ks[0], input_size, hidden_size)   # interface parity; unused (attn==identity)
    wk, bk = lin(ks[1], input_size, hidden_size)   # interface parity; unused
    wv, bv = lin(ks[2], input_size, hidden_size)
    w1, b1 = lin(ks[3], hidden_size, hidden_size)
    w2, b2 = lin(ks[4], hidden_size, hidden_size)
    w3, b3 = lin(ks[5], hidden_size, hidden_size)

    def bn(kg, kb, km, kv):
        g = 1.0 + 0.1 * jax.random.normal(kg, (1, hidden_size), jnp.float32)
        be = 0.1 * jax.random.normal(kb, (1, hidden_size), jnp.float32)
        rm = 0.1 * jax.random.normal(km, (1, hidden_size), jnp.float32)
        rv = 1.0 + 0.1 * jax.random.uniform(kv, (1, hidden_size), jnp.float32)
        return g, be, rm, rv

    g1, be1, rm1, rv1 = bn(ks[6], ks[7], ks[8], ks[9])
    g2, be2, rm2, rv2 = bn(ks[10], ks[11], ks[12], ks[13])

    return dict(
        wq=wq, bq=bq, wk=wk, bk=bk, wv=wv, bv=bv,
        w1=w1, b1=b1, g1=g1, be1=be1, rm1=rm1, rv1=rv1,
        w2=w2, b2=b2, g2=g2, be2=be2, rm2=rm2, rv2=rv2,
        w3=w3, b3=b3,
    )


def trunknet_ref(x, p):
    """Pure-JAX f32 reference with UNFOLDED params (eval-mode semantics)."""
    # softmax over seq_len == 1 -> attention weight is exactly 1 -> output == V
    h = x @ p["wv"] + p["bv"]
    h = h @ p["w1"] + p["b1"]
    h = (h - p["rm1"]) / jnp.sqrt(p["rv1"] + BN_EPS) * p["g1"] + p["be1"]
    h = jnp.maximum(h, 0.0)
    h = h @ p["w2"] + p["b2"]
    h = (h - p["rm2"]) / jnp.sqrt(p["rv2"] + BN_EPS) * p["g2"] + p["be2"]
    h = jnp.maximum(h, 0.0)
    return h @ p["w3"] + p["b3"]


if __name__ == "__main__":
    batch, input_size, hidden_size = 8, 16, 32
    key = jax.random.PRNGKey(0)
    kx, kp = jax.random.split(key)
    x = jax.random.normal(kx, (batch, input_size), jnp.float32)
    params = make_params(kp, input_size, hidden_size)

    ref = trunknet_ref(x, params)

    # Default path: bf16 streamed x / weights / output, f32 accumulate + epilogue.
    fwd_bf16 = build_trunknet_forward(params)
    out_bf16 = jax.block_until_ready(fwd_bf16(x))
    assert out_bf16.shape == (batch, hidden_size)
    assert jnp.allclose(out_bf16.astype(jnp.float32), ref, atol=5e-2, rtol=5e-2), \
        "bf16 path mismatch vs JAX reference"

    # Bit-close path: full f32 compute for parity with the PyTorch module.
    fwd_f32 = build_trunknet_forward(params, compute_dtype=jnp.float32)
    out_f32 = jax.block_until_ready(fwd_f32(x))
    assert out_f32.shape == (batch, hidden_size)
    assert jnp.allclose(out_f32, ref, atol=1e-4, rtol=1e-4), \
        "f32 path mismatch vs JAX reference"

    print("KERNEL_OK")
</pallas_src>

<mosaic_0001>
module attributes {stable_mosaic.version = 11 : i64} {
  func.func @trunknet_kernel(%arg0: i32, %arg1: memref<8x16xbf16, #tpu.memory_space<vmem>>, %arg2: memref<16x128xbf16, #tpu.memory_space<vmem>>, %arg3: memref<1x128xf32, #tpu.memory_space<vmem>>, %arg4: memref<128x128xbf16, #tpu.memory_space<vmem>>, %arg5: memref<1x128xf32, #tpu.memory_space<vmem>>, %arg6: memref<128x128xbf16, #tpu.memory_space<vmem>>, %arg7: memref<1x128xf32, #tpu.memory_space<vmem>>, %arg8: memref<8x128xbf16, #tpu.memory_space<vmem>>) attributes {dimension_semantics = [#tpu.dimension_semantics<parallel>], iteration_bounds = array<i64: 1>, scalar_prefetch = 0 : i64, scratch_operands = 0 : i64, tpu.core_type = #tpu.core_type<tc>, window_params = [{transform_indices = @transform_0, window_bounds = array<i64: 8, 16>}, {pipeline_mode = #tpu.pipeline_mode<synchronous>, transform_indices = @transform_1, window_bounds = array<i64: 16, 128>}, {pipeline_mode = #tpu.pipeline_mode<synchronous>, transform_indices = @transform_2, window_bounds = array<i64: 1, 128>}, {pipeline_mode = #tpu.pipeline_mode<synchronous>, transform_indices = @transform_3, window_bounds = array<i64: 128, 128>}, {pipeline_mode = #tpu.pipeline_mode<synchronous>, transform_indices = @transform_4, window_bounds = array<i64: 1, 128>}, {pipeline_mode = #tpu.pipeline_mode<synchronous>, transform_indices = @transform_5, window_bounds = array<i64: 128, 128>}, {pipeline_mode = #tpu.pipeline_mode<synchronous>, transform_indices = @transform_6, window_bounds = array<i64: 1, 128>}, {transform_indices = @transform_7, window_bounds = array<i64: 8, 128>}]} {
    %c0 = arith.constant 0 : index
    %c0_0 = arith.constant 0 : index
    %0 = vector.load %arg1[%c0, %c0_0] : memref<8x16xbf16, #tpu.memory_space<vmem>>, vector<8x16xbf16>
    %c0_1 = arith.constant 0 : index
    %c0_2 = arith.constant 0 : index
    %1 = vector.load %arg2[%c0_1, %c0_2] : memref<16x128xbf16, #tpu.memory_space<vmem>>, vector<16x128xbf16>
    %cst = arith.constant dense<0.000000e+00> : vector<8x128xf32>
    %2 = tpu.matmul %0, %1, %cst {dimension_numbers = #tpu.dot_dimension_numbers<[1], [0], [0], [1], [0, 0, 1, 1], [], []>} : vector<8x16xbf16>, vector<16x128xbf16>, vector<8x128xf32> -> vector<8x128xf32>
    %c0_3 = arith.constant 0 : index
    %c0_4 = arith.constant 0 : index
    %3 = vector.load %arg3[%c0_3, %c0_4] : memref<1x128xf32, #tpu.memory_space<vmem>>, vector<1x128xf32>
    %4 = vector.broadcast %3 : vector<1x128xf32> to vector<8x128xf32>
    %5 = arith.addf %2, %4 : vector<8x128xf32>
    %cst_5 = arith.constant 0.000000e+00 : f32
    %6 = vector.broadcast %cst_5 : f32 to vector<8x128xf32>
    %7 = arith.maximumf %5, %6 : vector<8x128xf32>
    %8 = arith.truncf %7 : vector<8x128xf32> to vector<8x128xbf16>
    %c0_6 = arith.constant 0 : index
    %c0_7 = arith.constant 0 : index
    %9 = vector.load %arg4[%c0_6, %c0_7] : memref<128x128xbf16, #tpu.memory_space<vmem>>, vector<128x128xbf16>
    %cst_8 = arith.constant dense<0.000000e+00> : vector<8x128xf32>
    %10 = tpu.matmul %8, %9, %cst_8 {dimension_numbers = #tpu.dot_dimension_numbers<[1], [0], [0], [1], [0, 0, 1, 1], [], []>} : vector<8x128xbf16>, vector<128x128xbf16>, vector<8x128xf32> -> vector<8x128xf32>
    %c0_9 = arith.constant 0 : index
    %c0_10 = arith.constant 0 : index
    %11 = vector.load %arg5[%c0_9, %c0_10] : memref<1x128xf32, #tpu.memory_space<vmem>>, vector<1x128xf32>
    %12 = vector.broadcast %11 : vector<1x128xf32> to vector<8x128xf32>
    %13 = arith.addf %10, %12 : vector<8x128xf32>
    %cst_11 = arith.constant 0.000000e+00 : f32
    %14 = vector.broadcast %cst_11 : f32 to vector<8x128xf32>
    %15 = arith.maximumf %13, %14 : vector<8x128xf32>
    %16 = arith.truncf %15 : vector<8x128xf32> to vector<8x128xbf16>
    %c0_12 = arith.constant 0 : index
    %c0_13 = arith.constant 0 : index
    %17 = vector.load %arg6[%c0_12, %c0_13] : memref<128x128xbf16, #tpu.memory_space<vmem>>, vector<128x128xbf16>
    %cst_14 = arith.constant dense<0.000000e+00> : vector<8x128xf32>
    %18 = tpu.matmul %16, %17, %cst_14 {dimension_numbers = #tpu.dot_dimension_numbers<[1], [0], [0], [1], [0, 0, 1, 1], [], []>} : vector<8x128xbf16>, vector<128x128xbf16>, vector<8x128xf32> -> vector<8x128xf32>
    %c0_15 = arith.constant 0 : index
    %c0_16 = arith.constant 0 : index
    %19 = vector.load %arg7[%c0_15, %c0_16] : memref<1x128xf32, #tpu.memory_space<vmem>>, vector<1x128xf32>
    %20 = vector.broadcast %19 : vector<1x128xf32> to vector<8x128xf32>
    %21 = arith.addf %18, %20 : vector<8x128xf32>
    %22 = arith.truncf %21 : vector<8x128xf32> to vector<8x128xbf16>
    %c0_17 = arith.constant 0 : index
    %c0_18 = arith.constant 0 : index
    %23 = vector.load %arg8[%c0_17, %c0_18] : memref<8x128xbf16, #tpu.memory_space<vmem>>, vector<8x128xbf16>
    tpu.vector_store %arg8[%c0_17, %c0_18], %22 {strides = array<i32>} : memref<8x128xbf16, #tpu.memory_space<vmem>>, vector<8x128xbf16>,
    return
  }
  func.func @transform_0(%arg0: i32) -> (i32, i32) {
    %c0_i32 = arith.constant 0 : i32
    %c0_i32_0 = arith.constant 0 : i32
    return %arg0, %c0_i32 : i32, i32
  }
  func.func @transform_1(%arg0: i32) -> (i32, i32) {
    %c0_i32 = arith.constant 0 : i32
    %c0_i32_0 = arith.constant 0 : i32
    %c0_i32_1 = arith.constant 0 : i32
    return %c0_i32, %c0_i32_0 : i32, i32
  }
  func.func @transform_2(%arg0: i32) -> (i32, i32) {
    %c0_i32 = arith.constant 0 : i32
    %c0_i32_0 = arith.constant 0 : i32
    %c0_i32_1 = arith.constant 0 : i32
    return %c0_i32, %c0_i32_0 : i32, i32
  }
  func.func @transform_3(%arg0: i32) -> (i32, i32) {
    %c0_i32 = arith.constant 0 : i32
    %c0_i32_0 = arith.constant 0 : i32
    %c0_i32_1 = arith.constant 0 : i32
    return %c0_i32, %c0_i32_0 : i32, i32
  }
  func.func @transform_4(%arg0: i32) -> (i32, i32) {
    %c0_i32 = arith.constant 0 : i32
    %c0_i32_0 = arith.constant 0 : i32
    %c0_i32_1 = arith.constant 0 : i32
    return %c0_i32, %c0_i32_0 : i32, i32
  }
  func.func @transform_5(%arg0: i32) -> (i32, i32) {
    %c0_i32 = arith.constant 0 : i32
    %c0_i32_0 = arith.constant 0 : i32
    %c0_i32_1 = arith.constant 0 : i32
    return %c0_i32, %c0_i32_0 : i32, i32
  }
  func.func @transform_6(%arg0: i32) -> (i32, i32) {
    %c0_i32 = arith.constant 0 : i32
    %c0_i32_0 = arith.constant 0 : i32
    %c0_i32_1 = arith.constant 0 : i32
    return %c0_i32, %c0_i32_0 : i32, i32
  }
  func.func @transform_7(%arg0: i32) -> (i32, i32) {
    %c0_i32 = arith.constant 0 : i32
    %c0_i32_0 = arith.constant 0 : i32
    return %arg0, %c0_i32 : i32, i32
  }
}

</mosaic_0001>

<llo_original>
// kernel: forward.1
$region0: #{forward.1}
  #allocation0 [shape = 'u32[]', space=smem, size = 0x4, offset = 0x4, fixed_abs, tag = 'smem constant byte address 0x4 - core index']
  #allocation1 [shape = 'u32[72,128]{1,0:T(1,128)}', space=vmem, size = 0x9000, scoped, tag = 'internal scratch']
  %s0 = inlined_call_operand.vmem [shape: bf16[8,16], index: 0, kind: input, shape index: {}]
  %s1 = inlined_call_operand.vmem [shape: bf16[16,128], index: 1, kind: input, shape index: {}]
  %s2 = inlined_call_operand.vmem [shape: f32[1,128], index: 2, kind: input, shape index: {}]
  %s3 = inlined_call_operand.hbm [shape: bf16[128,128], index: 3, kind: input, shape index: {}]
  %s4 = inlined_call_operand.vmem [shape: f32[1,128], index: 4, kind: input, shape index: {}]
  %s5 = inlined_call_operand.hbm [shape: bf16[128,128], index: 5, kind: input, shape index: {}]
  %s6 = inlined_call_operand.vmem [shape: f32[1,128], index: 6, kind: input, shape index: {}]
  %s7 = inlined_call_operand.hbm [shape: bf16[8,128], index: 7, kind: output, shape index: {}]
  %s8 = sld [smem:[#allocation0]]
  $region46: #{forward.1} parent=0
    _
  %s10 = ssub.s32 1, %s8
  %s11 = scalar_select 0, %s10, %s8
  $region1: #{forward.1} parent=0
    #allocation2 [shape = 'u8[32768]{0}', space=vmem, size = 0x8000, scoped, tag = 'input window, operand 3, single buffered']
    #allocation3 [shape = 's32[1]{0}', space=sflag, size = 0x4, scoped, tag = 'scoped memory for forward.1']
    #allocation4 [shape = 's32[1]{0}', space=sflag, size = 0x4, scoped, tag = 'scoped memory for forward.1']
    #allocation5 [shape = 'u8[32768]{0}', space=vmem, size = 0x8000, scoped, tag = 'input window, operand 5, single buffered']
    #allocation6 [shape = 's32[1]{0}', space=sflag, size = 0x4, scoped, tag = 'scoped memory for forward.1']
    #allocation7 [shape = 'u8[2048]{0}', space=vmem, size = 0x800, scoped, tag = 'output window, operand 0, single buffered']
    %12 = vsyncpa [#allocation3], 0
    %13 = vsyncpa [#allocation6], 0
    %14 = vsyncpa [#allocation4], 0
    // Predicated region
    $region2: #{forward.1} parent=1 // pred_check
      _
    $region3: #{forward.1} parent=1 // pred_check_branch
      %16 = sbr.rel (0) target = $region5
    $region4: #{forward.1} parent=1 // pred_region
      _
    $region5: #{forward.1} parent=1 // pred_fallthru
      _
    // Predicated region
    $region6: #{forward.1} parent=1 // pred_check
      _
    $region7: #{forward.1} parent=1 // pred_check_branch
      %18 = sbr.rel (0) target = $region9
    $region8: #{forward.1} parent=1 // pred_region
      _
    $region9: #{forward.1} parent=1 // pred_fallthru
      _
    // Predicated region
    $region10: #{forward.1} parent=1 // pred_check
      _
    $region11: #{forward.1} parent=1 // pred_check_branch
      %20 = sbr.rel (0) target = $region13
    $region12: #{forward.1} parent=1 // pred_region
      _
    $region13: #{forward.1} parent=1 // pred_fallthru
      _
    // Predicated region
    $region14: #{forward.1} parent=1 // pred_check
      _
    $region15: #{forward.1} parent=1 // pred_check_branch
      %22 = sbr.rel (0) target = $region17
    $region16: #{forward.1} parent=1 // pred_region
      %24 = vsyncadd [#allocation3], 0
      %s25 = sshll.u32 %s3, 4
      %s26 = int_to_ptr.hbm [resolvable:$true] %s25
      %s27 = sshll.u32 [#allocation2], 4
      %s28 = int_to_ptr.vmem [resolvable:$true] %s27
      %33 = dma.hbm_to_vmem [thread:$0]  %s26, 1024, %s28, [#allocation3], 64, 64, 4
    $region17: #{forward.1} parent=1 // pred_fallthru
      _
    // Predicated region
    $region18: #{forward.1} parent=1 // pred_check
      _
    $region19: #{forward.1} parent=1 // pred_check_branch
      %35 = sbr.rel (0) target = $region21
    $region20: #{forward.1} parent=1 // pred_region
      _
    $region21: #{forward.1} parent=1 // pred_fallthru
      _
    // Predicated region
    $region22: #{forward.1} parent=1 // pred_check
      _
    $region23: #{forward.1} parent=1 // pred_check_branch
      %37 = sbr.rel (0) target = $region25
    $region24: #{forward.1} parent=1 // pred_region
      %39 = vsyncadd [#allocation6], 0
      %s40 = sshll.u32 %s5, 4
      %s41 = int_to_ptr.hbm [resolvable:$true] %s40
      %s42 = sshll.u32 [#allocation5], 4
      %s43 = int_to_ptr.vmem [resolvable:$true] %s42
      %48 = dma.hbm_to_vmem [thread:$0]  %s41, 1024, %s43, [#allocation6], 64, 64, 4
    $region25: #{forward.1} parent=1 // pred_fallthru
      _
    // Predicated region
    $region26: #{forward.1} parent=1 // pred_check
      _
    $region27: #{forward.1} parent=1 // pred_check_branch
      %50 = sbr.rel (0) target = $region29
    $region28: #{forward.1} parent=1 // pred_region
      _
    $region29: #{forward.1} parent=1 // pred_fallthru
      _
    // Predicated region
    $region30: #{forward.1} parent=1 // pred_check
      _
    $region31: #{forward.1} parent=1 // pred_check_branch
      %52 = sbr.rel (0) target = $region33
    $region32: #{forward.1} parent=1 // pred_region
      %54 = dma.done [#allocation3], 1024
    $region33: #{forward.1} parent=1 // pred_fallthru
      _
    // Predicated region
    $region34: #{forward.1} parent=1 // pred_check
      _
    $region35: #{forward.1} parent=1 // pred_check_branch
      %56 = sbr.rel (0) target = $region37
    $region36: #{forward.1} parent=1 // pred_region
      %58 = dma.done [#allocation6], 1024
    $region37: #{forward.1} parent=1 // pred_fallthru
      _
    %v60 = vld [vmem:[%s0] sm:$0xf]
    %v61 = vld [vmem:[%s1] sm:$0xf]
    %v62 = vld [vmem:[%s1 + $0x4] sm:$0xf]
    %v63 = vld [vmem:[%s2] sm:$0x1]
    %v65 = vperm.slane %v63, 0
    %v69 = vunpack.c.l.b16 %v61
    %v70 = vunpack.c.l.b16 %v62
    %v71 = vpack.c.b16 %v70, %v69
    %vm73 = vcmask 130048
    %v75 = vsel %vm73, %v60, 0
    %77 = vmatpush.bf16.msra.mxu0 0
    %78 = vmatpush.bf16.msra.mxu0 0
    %79 = vmatpush.bf16.msra.mxu0 0
    %80 = vmatpush.bf16.msra.mxu0 0
    %81 = vmatpush.bf16.msra.mxu0 0
    %82 = vmatpush.bf16.msra.mxu0 0
    %83 = vmatpush.bf16.msra.mxu0 0
    %84 = vmatpush.bf16.msra.mxu0 %v71
    %85 = vmatmul.bf16.gmra.mxu0 %v75
    %v86 = vpop.f32.mrf.mxu0
    %v87 = vadd.f32 %v65, %v86
    %v88 = vpop.f32.mrf.mxu0
    %89 = vdwg.mxu0
    %v90 = vmax.f32 %v87, 0.0
    %v91 = vpack.c.bf16 %v90, %v90
    %v92 = vld [vmem:[#allocation2] sm:$0xf]
    %v93 = vld [vmem:[#allocation2 + $0x4] sm:$0xf]
    %v94 = vld [vmem:[#allocation2 + $0x8] sm:$0xf]
    %v95 = vld [vmem:[#allocation2 + $0xc] sm:$0xf]
    %v96 = vld [vmem:[#allocation2 + $0x10] sm:$0xf]
    %v97 = vld [vmem:[#allocation2 + $0x14] sm:$0xf]
    %v98 = vld [vmem:[#allocation2 + $0x18] sm:$0xf]
    %v99 = vld [vmem:[#allocation2 + $0x1c] sm:$0xf]
    %v100 = vld [vmem:[#allocation2 + $0x20] sm:$0xf]
    %v101 = vld [vmem:[#allocation2 + $0x24] sm:$0xf]
    %v102 = vld [vmem:[#allocation2 + $0x28] sm:$0xf]
    %v103 = vld [vmem:[#allocation2 + $0x2c] sm:$0xf]
    %v104 = vld [vmem:[#allocation2 + $0x30] sm:$0xf]
    %v105 = vld [vmem:[#allocation2 + $0x34] sm:$0xf]
    %v106 = vld [vmem:[#allocation2 + $0x38] sm:$0xf]
    %v107 = vld [vmem:[#allocation2 + $0x3c] sm:$0xf]
    %v108 = vld [vmem:[%s4] sm:$0x1]
    %v110 = vperm.slane %v108, 0
    %v128 = vunpack.c.l.b16 %v92
    %v129 = vunpack.c.l.b16 %v93
    %v130 = vunpack.c.l.b16 %v94
    %v131 = vunpack.c.l.b16 %v95
    %v132 = vunpack.c.l.b16 %v96
    %v133 = vunpack.c.l.b16 %v97
    %v134 = vunpack.c.l.b16 %v98
    %v135 = vunpack.c.l.b16 %v99
    %v136 = vunpack.c.l.b16 %v100
    %v137 = vunpack.c.l.b16 %v101
    %v138 = vunpack.c.l.b16 %v102
    %v139 = vunpack.c.l.b16 %v103
    %v140 = vunpack.c.l.b16 %v104
    %v141 = vunpack.c.l.b16 %v105
    %v142 = vunpack.c.l.b16 %v106
    %v143 = vunpack.c.l.b16 %v107
    %v144 = vpack.c.b16 %v129, %v128
    %v145 = vpack.c.b16 %v131, %v130
    %v146 = vpack.c.b16 %v133, %v132
    %v147 = vpack.c.b16 %v135, %v134
    %v148 = vpack.c.b16 %v137, %v136
    %v149 = vpack.c.b16 %v139, %v138
    %v150 = vpack.c.b16 %v141, %v140
    %v151 = vpack.c.b16 %v143, %v142
    %160 = vmatpush.bf16.msra.mxu0 %v151
    %161 = vmatpush.bf16.msra.mxu0 %v150
    %162 = vmatpush.bf16.msra.mxu0 %v149
    %163 = vmatpush.bf16.msra.mxu0 %v148
    %164 = vmatpush.bf16.msra.mxu0 %v147
    %165 = vmatpush.bf16.msra.mxu0 %v146
    %166 = vmatpush.bf16.msra.mxu0 %v145
    %167 = vmatpush.bf16.msra.mxu0 %v144
    %168 = vmatmul.bf16.gmra.mxu0 %v91
    %v169 = vpop.f32.mrf.mxu0
    %v170 = vadd.f32 %v110, %v169
    %v171 = vpop.f32.mrf.mxu0
    %172 = vdwg.mxu0
    %v173 = vmax.f32 %v170, 0.0
    %v174 = vpack.c.bf16 %v173, %v173
    %v175 = vld [vmem:[#allocation5] sm:$0xf]
    %v176 = vld [vmem:[#allocation5 + $0x4] sm:$0xf]
    %v177 = vld [vmem:[#allocation5 + $0x8] sm:$0xf]
    %v178 = vld [vmem:[#allocation5 + $0xc] sm:$0xf]
    %v179 = vld [vmem:[#allocation5 + $0x10] sm:$0xf]
    %v180 = vld [vmem:[#allocation5 + $0x14] sm:$0xf]
    %v181 = vld [vmem:[#allocation5 + $0x18] sm:$0xf]
    %v182 = vld [vmem:[#allocation5 + $0x1c] sm:$0xf]
    %v183 = vld [vmem:[#allocation5 + $0x20] sm:$0xf]
    %v184 = vld [vmem:[#allocation5 + $0x24] sm:$0xf]
    %v185 = vld [vmem:[#allocation5 + $0x28] sm:$0xf]
    %v186 = vld [vmem:[#allocation5 + $0x2c] sm:$0xf]
    %v187 = vld [vmem:[#allocation5 + $0x30] sm:$0xf]
    %v188 = vld [vmem:[#allocation5 + $0x34] sm:$0xf]
    %v189 = vld [vmem:[#allocation5 + $0x38] sm:$0xf]
    %v190 = vld [vmem:[#allocation5 + $0x3c] sm:$0xf]
    %v191 = vld [vmem:[%s6] sm:$0x1]
    %v193 = vperm.slane %v191, 0
    %v211 = vunpack.c.l.b16 %v175
    %v212 = vunpack.c.l.b16 %v176
    %v213 = vunpack.c.l.b16 %v177
    %v214 = vunpack.c.l.b16 %v178
    %v215 = vunpack.c.l.b16 %v179
    %v216 = vunpack.c.l.b16 %v180
    %v217 = vunpack.c.l.b16 %v181
    %v218 = vunpack.c.l.b16 %v182
    %v219 = vunpack.c.l.b16 %v183
    %v220 = vunpack.c.l.b16 %v184
    %v221 = vunpack.c.l.b16 %v185
    %v222 = vunpack.c.l.b16 %v186
    %v223 = vunpack.c.l.b16 %v187
    %v224 = vunpack.c.l.b16 %v188
    %v225 = vunpack.c.l.b16 %v189
    %v226 = vunpack.c.l.b16 %v190
    %v227 = vpack.c.b16 %v212, %v211
    %v228 = vpack.c.b16 %v214, %v213
    %v229 = vpack.c.b16 %v216, %v215
    %v230 = vpack.c.b16 %v218, %v217
    %v231 = vpack.c.b16 %v220, %v219
    %v232 = vpack.c.b16 %v222, %v221
    %v233 = vpack.c.b16 %v224, %v223
    %v234 = vpack.c.b16 %v226, %v225
    %243 = vmatpush.bf16.msra.mxu0 %v234
    %244 = vmatpush.bf16.msra.mxu0 %v233
    %245 = vmatpush.bf16.msra.mxu0 %v232
    %246 = vmatpush.bf16.msra.mxu0 %v231
    %247 = vmatpush.bf16.msra.mxu0 %v230
    %248 = vmatpush.bf16.msra.mxu0 %v229
    %249 = vmatpush.bf16.msra.mxu0 %v228
    %250 = vmatpush.bf16.msra.mxu0 %v227
    %251 = vmatmul.bf16.gmra.mxu0 %v174
    %v252 = vpop.f32.mrf.mxu0
    %v253 = vadd.f32 %v193, %v252
    %v254 = vpop.f32.mrf.mxu0
    %255 = vdwg.mxu0
    %v256 = vpack.c.bf16 %v253, %v253
    %257 = vst [vmem:[#allocation7] sm:$0xf] %v256
    // Predicated region
    $region38: #{forward.1} parent=1 // pred_check
      _
    $region39: #{forward.1} parent=1 // pred_check_branch
      %259 = sbr.rel (0) target = $region41
    $region40: #{forward.1} parent=1 // pred_region
      %261 = vsyncadd [#allocation4], 0
      %s263 = sshll.u32 [#allocation7], 4
      %s264 = int_to_ptr.vmem [resolvable:$true] %s263
      %s265 = sshll.u32 %s7, 4
      %s266 = int_to_ptr.hbm [resolvable:$true] %s265
      %268 = dma.vmem_to_hbm [thread:$0]  %s264, 64, %s266, [#allocation4]
    $region41: #{forward.1} parent=1 // pred_fallthru
      _
    // Predicated region
    $region42: #{forward.1} parent=1 // pred_check
      _
    $region43: #{forward.1} parent=1 // pred_check_branch
      %270 = sbr.rel (0) target = $region45
    $region44: #{forward.1} parent=1 // pred_region
      %272 = dma.done [#allocation4], 64
    $region45: #{forward.1} parent=1 // pred_fallthru
      _
    %273 = vsyncpa [#allocation3], 1
    %274 = vsyncpa [#allocation6], 1
    %275 = vsyncpa [#allocation4], 1

</llo_original>
